<compile_context>
chip_gen: v5e
topology: v5e:2x2
jax: 0.10.0
libtpu: 0.0.40
codegen_flags: <defaults>
</compile_context>

<pallas_src>
import jax
import jax.numpy as jnp
from jax import lax
from jax.experimental import pallas as pl
from jax.experimental.pallas import tpu as pltpu

_LPAD = 128  # lane-padded width of fc3 heads / logits / output


def _round_up(x, m):
    return ((x + m - 1) // m) * m


def _policy_kernel(dim_ref, scales_ref,              # scalar prefetch (SMEM)
                   x_ref, w1_ref, w2_ref,            # inputs (VMEM)
                   w3_ref, bias_ref,
                   o_ref):                           # output (VMEM)
    i = pl.program_id(0)
    h = dim_ref[i]                                   # this query's dimension index

    # fc1 (+ folded bias) + relu : (1, Dp) @ (Dp, 128) -> (1, 128)
    x = x_ref[0]                                     # (1, Dp) bf16
    h1 = jnp.dot(x, w1_ref[...], preferred_element_type=jnp.float32)
    h1 = jnp.maximum(h1, 0.0)

    # per-head bias rows (row 0: fc2 bias, row 1: fc3[h] bias), resident in VMEM
    bias = bias_ref[pl.ds(h, 1)][0]                  # (2, 128) f32

    # fc2 + relu : (1, 128) @ (128, 64) -> (1, 64)
    h2 = jnp.dot(h1.astype(jnp.bfloat16), w2_ref[...],
                 preferred_element_type=jnp.float32)
    h2 = jnp.maximum(h2 + bias[0:1, 0:64], 0.0)

    # fc3[dimension_index] : (1, 64) @ (64, 128) -> (1, 128)
    w3h = w3_ref[pl.ds(h, 1)][0]                     # (64, 128) bf16, resident
    logits = jnp.dot(h2.astype(jnp.bfloat16), w3h,
                     preferred_element_type=jnp.float32)
    logits = logits + bias[1:2, :]

    # masked softmax over the valid action_scale of the selected head.
    # NB: scale is always >= 1 here; a zero scale would make all logits -inf.
    scale = scales_ref[h]
    col = lax.broadcasted_iota(jnp.int32, (1, _LPAD), 1)
    logits = jnp.where(col < scale, logits, -jnp.inf)

    m = jnp.max(logits, axis=-1, keepdims=True)
    e = jnp.exp(logits - m)                          # padding -> exactly 0
    denom = jnp.sum(e, axis=-1, keepdims=True)
    o_ref[0] = e * pl.reciprocal(denom, approx=True)


def policy_forward_batch(params, states, dimension_indices, space_lenth):
    """Batched Pallas forward.

    states: (B, space_lenth) f32, dimension_indices: (B,) int.
    Returns (B, max_action_scale) probabilities; entries beyond each query's
    own action_scale are exactly 0.
    """
    w1p, w2, w3, bias_pack, scales, smax = params
    d_pad = w1p.shape[0]
    nh = w3.shape[0]
    B, L = states.shape

    dim_idx = jnp.asarray(dimension_indices, jnp.int32)
    dim_norm = dim_idx.astype(jnp.float32) / float(space_lenth)

    # [state, dim_idx/space_lenth, 1.0 (folded-bias column), zero padding]
    x = jnp.concatenate(
        [states.astype(jnp.float32),
         dim_norm[:, None],
         jnp.ones((B, 1), jnp.float32),
         jnp.zeros((B, d_pad - L - 2), jnp.float32)],
        axis=-1).astype(jnp.bfloat16).reshape(B, 1, d_pad)

    out = pl.pallas_call(
        _policy_kernel,
        out_shape=jax.ShapeDtypeStruct((B, 1, _LPAD), jnp.float32),
        grid_spec=pltpu.PrefetchScalarGridSpec(
            num_scalar_prefetch=2,
            grid=(B,),
            in_specs=[
                pl.BlockSpec((1, 1, d_pad), lambda i, di, sc: (i, 0, 0)),       # x (per query)
                pl.BlockSpec((d_pad, 128), lambda i, di, sc: (0, 0)),           # w1 (resident)
                pl.BlockSpec((128, 64), lambda i, di, sc: (0, 0)),              # w2 (resident)
                pl.BlockSpec((nh, 64, _LPAD), lambda i, di, sc: (0, 0, 0)),     # all fc3 heads (resident)
                pl.BlockSpec((nh, 2, _LPAD), lambda i, di, sc: (0, 0, 0)),      # b2/b3 pack (resident)
            ],
            out_specs=pl.BlockSpec((1, 1, _LPAD), lambda i, di, sc: (i, 0, 0)),
        ),
        compiler_params=pltpu.CompilerParams(
            dimension_semantics=("parallel",)),
    )(dim_idx, scales, x, w1p, w2, w3, bias_pack)

    return out[:, 0, :smax]


def policy_forward(params, qfunction_input, dimension_index, space_lenth):
    """Single-query convenience wrapper matching the PyTorch forward signature."""
    probs = policy_forward_batch(
        params,
        jnp.asarray(qfunction_input, jnp.float32)[None, :],
        jnp.asarray([dimension_index], jnp.int32),
        space_lenth)
    return probs[0]


def init_params(key, space_lenth, action_scale_list):
    """Deterministic init mimicking torch.nn.Linear (uniform +/- 1/sqrt(fan_in)),
    stored in the packed / padded / bf16 layout the kernel expects."""
    L = space_lenth
    d = L + 1                       # real fc1 input features
    d_pad = _round_up(d + 1, 8)     # +1 constant column for the folded bias
    nh = len(action_scale_list)
    smax = max(action_scale_list)
    ks = jax.random.split(key, 5)

    def lin(kw, kb, fan_in, fan_out):
        bound = fan_in ** -0.5
        w = jax.random.uniform(kw, (fan_in, fan_out), jnp.float32, -bound, bound)
        b = jax.random.uniform(kb, (fan_out,), jnp.float32, -bound, bound)
        return w, b

    w1, b1 = lin(ks[0], ks[1], d, 128)
    w2, b2 = lin(ks[2], ks[3], 128, 64)

    # fc1 with bias folded in as an extra row; leading dim padded to d_pad.
    w1p = jnp.zeros((d_pad, 128), jnp.float32)
    w1p = w1p.at[:d, :].set(w1).at[d, :].set(b1)

    # stacked, lane-padded fc3 heads + packed (b2, b3[head]) bias tensor.
    w3 = jnp.zeros((nh, 64, _LPAD), jnp.float32)
    bias_pack = jnp.zeros((nh, 2, _LPAD), jnp.float32)
    bias_pack = bias_pack.at[:, 0, :64].set(b2)      # row 0: fc2 bias (all heads)
    hkeys = jax.random.split(ks[4], 2 * nh)
    for h, a in enumerate(action_scale_list):
        wh, bh = lin(hkeys[2 * h], hkeys[2 * h + 1], 64, a)
        w3 = w3.at[h, :, :a].set(wh)
        bias_pack = bias_pack.at[h, 1, :a].set(bh)   # row 1: fc3[h] bias

    scales = jnp.array(action_scale_list, dtype=jnp.int32)
    return (w1p.astype(jnp.bfloat16),
            w2.astype(jnp.bfloat16),
            w3.astype(jnp.bfloat16),
            bias_pack,
            scales,
            smax)


def _reference_forward(params, state, dimension_index, space_lenth):
    """Plain-JAX reference mirroring the kernel math (bf16 weights/activations,
    f32 accumulation, exact softmax)."""
    w1p, w2, w3, bias_pack, scales, smax = params
    d_pad = w1p.shape[0]
    L = state.shape[0]
    hi = jax.lax.Precision.HIGHEST

    x = jnp.zeros((d_pad,), jnp.float32)
    x = x.at[:L].set(state).at[L].set(dimension_index / space_lenth).at[L + 1].set(1.0)
    x = x.astype(jnp.bfloat16).astype(jnp.float32)

    h1 = jnp.maximum(jnp.dot(x, w1p.astype(jnp.float32), precision=hi), 0.0)
    h1 = h1.astype(jnp.bfloat16).astype(jnp.float32)
    h2 = jnp.maximum(jnp.dot(h1, w2.astype(jnp.float32), precision=hi)
                     + bias_pack[dimension_index, 0, :64], 0.0)
    h2 = h2.astype(jnp.bfloat16).astype(jnp.float32)

    a = int(scales[dimension_index])
    logits = (jnp.dot(h2, w3[dimension_index].astype(jnp.float32)[:, :a], precision=hi)
              + bias_pack[dimension_index, 1, :a])
    probs = jax.nn.softmax(logits, axis=-1)
    return jnp.concatenate([probs, jnp.zeros((smax - a,), jnp.float32)])


if __name__ == "__main__":
    space_lenth = 8
    action_scale_list = [6, 4, 8, 5]

    key = jax.random.PRNGKey(0)
    kp, kx = jax.random.split(key)
    params = init_params(kp, space_lenth, action_scale_list)
    smax = params[-1]

    # batched queries (one per design-space dimension, like the RL loop).
    B = 4
    states = jax.random.normal(kx, (B, space_lenth), jnp.float32)
    dim_indices = jnp.array([2, 0, 3, 1], dtype=jnp.int32)

    probs = policy_forward_batch(params, states, dim_indices, space_lenth)
    probs = jax.block_until_ready(probs)
    assert probs.shape == (B, smax)

    for b in range(B):
        ref = _reference_forward(params, states[b], int(dim_indices[b]), space_lenth)
        assert jnp.allclose(jnp.sum(probs[b]), 1.0, atol=5e-3), (b, float(jnp.sum(probs[b])))
        assert jnp.allclose(probs[b], ref, atol=5e-3, rtol=5e-3), (b, probs[b], ref)

    # single-query path matching the original module's forward signature.
    p1 = policy_forward(params, states[0], 2, space_lenth)
    p1 = jax.block_until_ready(p1)
    assert p1.shape == (smax,)
    assert jnp.allclose(p1, probs[0], atol=1e-5)

    print("KERNEL_OK")
</pallas_src>

<mosaic_0001>
module attributes {stable_mosaic.version = 11 : i64} {
  func.func @_policy_kernel(%arg0: i32, %arg1: memref<4xi32, #tpu.memory_space<smem>>, %arg2: memref<4xi32, #tpu.memory_space<smem>>, %arg3: memref<1x1x16xbf16, #tpu.memory_space<vmem>>, %arg4: memref<16x128xbf16, #tpu.memory_space<vmem>>, %arg5: memref<128x64xbf16, #tpu.memory_space<vmem>>, %arg6: memref<4x64x128xbf16, #tpu.memory_space<vmem>>, %arg7: memref<4x2x128xf32, #tpu.memory_space<vmem>>, %arg8: memref<1x1x128xf32, #tpu.memory_space<vmem>>) attributes {dimension_semantics = [#tpu.dimension_semantics<parallel>], iteration_bounds = array<i64: 4>, scalar_prefetch = 2 : i64, scratch_operands = 0 : i64, tpu.core_type = #tpu.core_type<tc>, window_params = [{transform_indices = @transform_0, window_bounds = array<i64: 1, 1, 16>}, {pipeline_mode = #tpu.pipeline_mode<synchronous>, transform_indices = @transform_1, window_bounds = array<i64: 16, 128>}, {pipeline_mode = #tpu.pipeline_mode<synchronous>, transform_indices = @transform_2, window_bounds = array<i64: 128, 64>}, {pipeline_mode = #tpu.pipeline_mode<synchronous>, transform_indices = @transform_3, window_bounds = array<i64: 4, 64, 128>}, {pipeline_mode = #tpu.pipeline_mode<synchronous>, transform_indices = @transform_4, window_bounds = array<i64: 4, 2, 128>}, {transform_indices = @transform_5, window_bounds = array<i64: 1, 1, 128>}]} {
    %0 = arith.index_cast %arg0 : i32 to index
    %1 = memref.load %arg1[%0] : memref<4xi32, #tpu.memory_space<smem>>
    %c0 = arith.constant 0 : index
    %c0_0 = arith.constant 0 : index
    %c0_1 = arith.constant 0 : index
    %2 = vector.load %arg3[%c0, %c0_0, %c0_1] : memref<1x1x16xbf16, #tpu.memory_space<vmem>>, vector<1x1x16xbf16>
    %3 = vector.shape_cast %2 : vector<1x1x16xbf16> to vector<1x16xbf16>
    %c0_2 = arith.constant 0 : index
    %c0_3 = arith.constant 0 : index
    %4 = vector.load %arg4[%c0_2, %c0_3] : memref<16x128xbf16, #tpu.memory_space<vmem>>, vector<16x128xbf16>
    %cst = arith.constant dense<0.000000e+00> : vector<1x128xf32>
    %5 = tpu.matmul %3, %4, %cst {dimension_numbers = #tpu.dot_dimension_numbers<[1], [0], [0], [1], [0, 0, 1, 1], [], []>} : vector<1x16xbf16>, vector<16x128xbf16>, vector<1x128xf32> -> vector<1x128xf32>
    %cst_4 = arith.constant 0.000000e+00 : f32
    %6 = vector.broadcast %cst_4 : f32 to vector<1x128xf32>
    %7 = arith.maximumf %5, %6 : vector<1x128xf32>
    %8 = arith.index_cast %1 : i32 to index
    %c0_5 = arith.constant 0 : index
    %c0_6 = arith.constant 0 : index
    %9 = vector.load %arg7[%8, %c0_5, %c0_6] : memref<4x2x128xf32, #tpu.memory_space<vmem>>, vector<1x2x128xf32>
    %10 = vector.shape_cast %9 : vector<1x2x128xf32> to vector<2x128xf32>
    %11 = arith.truncf %7 : vector<1x128xf32> to vector<1x128xbf16>
    %c0_7 = arith.constant 0 : index
    %c0_8 = arith.constant 0 : index
    %12 = vector.load %arg5[%c0_7, %c0_8] : memref<128x64xbf16, #tpu.memory_space<vmem>>, vector<128x64xbf16>
    %cst_9 = arith.constant dense<0.000000e+00> : vector<1x64xf32>
    %13 = tpu.matmul %11, %12, %cst_9 {dimension_numbers = #tpu.dot_dimension_numbers<[1], [0], [0], [1], [0, 0, 1, 1], [], []>} : vector<1x128xbf16>, vector<128x64xbf16>, vector<1x64xf32> -> vector<1x64xf32>
    %14 = vector.extract_strided_slice %10 {offsets = [0, 0], sizes = [1, 64], strides = [1, 1]} : vector<2x128xf32> to vector<1x64xf32>
    %15 = arith.addf %13, %14 : vector<1x64xf32>
    %cst_10 = arith.constant 0.000000e+00 : f32
    %16 = vector.broadcast %cst_10 : f32 to vector<1x64xf32>
    %17 = arith.maximumf %15, %16 : vector<1x64xf32>
    %18 = arith.index_cast %1 : i32 to index
    %c0_11 = arith.constant 0 : index
    %c0_12 = arith.constant 0 : index
    %19 = vector.load %arg6[%18, %c0_11, %c0_12] : memref<4x64x128xbf16, #tpu.memory_space<vmem>>, vector<1x64x128xbf16>
    %20 = vector.shape_cast %19 : vector<1x64x128xbf16> to vector<64x128xbf16>
    %21 = arith.truncf %17 : vector<1x64xf32> to vector<1x64xbf16>
    %cst_13 = arith.constant dense<0.000000e+00> : vector<1x128xf32>
    %22 = tpu.matmul %21, %20, %cst_13 {dimension_numbers = #tpu.dot_dimension_numbers<[1], [0], [0], [1], [0, 0, 1, 1], [], []>} : vector<1x64xbf16>, vector<64x128xbf16>, vector<1x128xf32> -> vector<1x128xf32>
    %23 = vector.extract_strided_slice %10 {offsets = [1, 0], sizes = [1, 128], strides = [1, 1]} : vector<2x128xf32> to vector<1x128xf32>
    %24 = arith.addf %22, %23 : vector<1x128xf32>
    %25 = arith.index_cast %1 : i32 to index
    %26 = memref.load %arg2[%25] : memref<4xi32, #tpu.memory_space<smem>>
    %27 = tpu.iota {dimensions = array<i32: 1>} : vector<1x128xi32>
    %28 = vector.broadcast %26 : i32 to vector<1x128xi32>
    %29 = arith.cmpi slt, %27, %28 : vector<1x128xi32>
    %cst_14 = arith.constant 0xFF800000 : f32
    %30 = vector.broadcast %cst_14 : f32 to vector<1x128xf32>
    %31 = arith.select %29, %24, %30 : vector<1x128xi1>, vector<1x128xf32>
    %cst_15 = arith.constant dense<0xFF800000> : vector<1xf32>
    %32 = vector.multi_reduction <maximumf>, %31, %cst_15 [1] : vector<1x128xf32> to vector<1xf32>
    %33 = vector.shape_cast %32 : vector<1xf32> to vector<1x1xf32>
    %34 = vector.broadcast %33 : vector<1x1xf32> to vector<1x128xf32>
    %35 = arith.subf %31, %34 : vector<1x128xf32>
    %36 = math.exp %35 : vector<1x128xf32>
    %cst_16 = arith.constant dense<0.000000e+00> : vector<1xf32>
    %37 = vector.multi_reduction <add>, %36, %cst_16 [1] : vector<1x128xf32> to vector<1xf32>
    %38 = vector.shape_cast %37 : vector<1xf32> to vector<1x1xf32>
    %39 = tpu.reciprocal %38 {approx = true} : vector<1x1xf32> -> vector<1x1xf32>
    %40 = vector.broadcast %39 : vector<1x1xf32> to vector<1x128xf32>
    %41 = arith.mulf %36, %40 : vector<1x128xf32>
    %c0_17 = arith.constant 0 : index
    %c0_18 = arith.constant 0 : index
    %c0_19 = arith.constant 0 : index
    %42 = vector.load %arg8[%c0_17, %c0_18, %c0_19] : memref<1x1x128xf32, #tpu.memory_space<vmem>>, vector<1x1x128xf32>
    %43 = vector.shape_cast %42 : vector<1x1x128xf32> to vector<1x128xf32>
    %44 = vector.shape_cast %41 : vector<1x128xf32> to vector<1x1x128xf32>
    tpu.vector_store %arg8[%c0_17, %c0_18, %c0_19], %44 {strides = array<i32>} : memref<1x1x128xf32, #tpu.memory_space<vmem>>, vector<1x1x128xf32>,
    return
  }
  func.func @transform_0(%arg0: i32, %arg1: memref<4xi32, #tpu.memory_space<smem>>, %arg2: memref<4xi32, #tpu.memory_space<smem>>) -> (i32, i32, i32) {
    %c0_i32 = arith.constant 0 : i32
    %c0_i32_0 = arith.constant 0 : i32
    %c0_i32_1 = arith.constant 0 : i32
    return %arg0, %c0_i32, %c0_i32_0 : i32, i32, i32
  }
  func.func @transform_1(%arg0: i32, %arg1: memref<4xi32, #tpu.memory_space<smem>>, %arg2: memref<4xi32, #tpu.memory_space<smem>>) -> (i32, i32) {
    %c0_i32 = arith.constant 0 : i32
    %c0_i32_0 = arith.constant 0 : i32
    %c0_i32_1 = arith.constant 0 : i32
    return %c0_i32, %c0_i32_0 : i32, i32
  }
  func.func @transform_2(%arg0: i32, %arg1: memref<4xi32, #tpu.memory_space<smem>>, %arg2: memref<4xi32, #tpu.memory_space<smem>>) -> (i32, i32) {
    %c0_i32 = arith.constant 0 : i32
    %c0_i32_0 = arith.constant 0 : i32
    %c0_i32_1 = arith.constant 0 : i32
    return %c0_i32, %c0_i32_0 : i32, i32
  }
  func.func @transform_3(%arg0: i32, %arg1: memref<4xi32, #tpu.memory_space<smem>>, %arg2: memref<4xi32, #tpu.memory_space<smem>>) -> (i32, i32, i32) {
    %c0_i32 = arith.constant 0 : i32
    %c0_i32_0 = arith.constant 0 : i32
    %c0_i32_1 = arith.constant 0 : i32
    %c0_i32_2 = arith.constant 0 : i32
    return %c0_i32, %c0_i32_0, %c0_i32_1 : i32, i32, i32
  }
  func.func @transform_4(%arg0: i32, %arg1: memref<4xi32, #tpu.memory_space<smem>>, %arg2: memref<4xi32, #tpu.memory_space<smem>>) -> (i32, i32, i32) {
    %c0_i32 = arith.constant 0 : i32
    %c0_i32_0 = arith.constant 0 : i32
    %c0_i32_1 = arith.constant 0 : i32
    %c0_i32_2 = arith.constant 0 : i32
    return %c0_i32, %c0_i32_0, %c0_i32_1 : i32, i32, i32
  }
  func.func @transform_5(%arg0: i32, %arg1: memref<4xi32, #tpu.memory_space<smem>>, %arg2: memref<4xi32, #tpu.memory_space<smem>>) -> (i32, i32, i32) {
    %c0_i32 = arith.constant 0 : i32
    %c0_i32_0 = arith.constant 0 : i32
    %c0_i32_1 = arith.constant 0 : i32
    return %arg0, %c0_i32, %c0_i32_0 : i32, i32, i32
  }
}

</mosaic_0001>

<llo_original>
// kernel: tpu_custom_call.1
$region0: #{tpu_custom_call.1}
  #allocation0 [shape = 'u32[]', space=smem, size = 0x4, offset = 0x4, fixed_abs, tag = 'smem constant byte address 0x4 - core index']
  #allocation1 [shape = 'u32[72,128]{1,0:T(1,128)}', space=vmem, size = 0x9000, scoped, tag = 'internal scratch']
  #allocation2 [shape = 's32[1]{0}', space=sflag, size = 0x4, scoped, tag = 'scoped memory for tpu_custom_call.1']
  #allocation3 [shape = 'u8[512]{0}', space=smem, size = 0x200, scoped, tag = 'prefetched SMEM operand 0']
  #allocation4 [shape = 'u8[512]{0}', space=smem, size = 0x200, scoped, tag = 'prefetched SMEM operand 1']
  %s0 = inlined_call_operand.vmem [shape: s32[4], index: 0, kind: input, shape index: {}]
  %s1 = inlined_call_operand.vmem [shape: s32[4], index: 1, kind: input, shape index: {}]
  %s2 = inlined_call_operand.vmem [shape: bf16[4,1,16], index: 2, kind: input, shape index: {}]
  %s3 = inlined_call_operand.vmem [shape: bf16[16,128], index: 3, kind: input, shape index: {}]
  %s4 = inlined_call_operand.vmem [shape: bf16[128,64], index: 4, kind: input, shape index: {}]
  %s5 = inlined_call_operand.hbm [shape: bf16[4,64,128], index: 5, kind: input, shape index: {}]
  %s6 = inlined_call_operand.vmem [shape: f32[4,2,128], index: 6, kind: input, shape index: {}]
  %s7 = inlined_call_operand.hbm [shape: f32[4,1,128], index: 7, kind: output, shape index: {}]
  %s8 = sld [smem:[#allocation0]]
  $region57: #{tpu_custom_call.1} parent=0
    _
  %s10 = ssub.s32 1, %s8
  %s11 = scalar_select 0, %s10, %s8
  %s13 = sshll.u32 %s0, 4
  %s14 = int_to_ptr.vmem [resolvable:$true] %s13
  %16 = dma.vmem_to_smem %s14, 16, [#allocation3], [#allocation2]
  %s18 = sshll.u32 %s1, 4
  %s19 = int_to_ptr.vmem [resolvable:$true] %s18
  %21 = dma.vmem_to_smem %s19, 16, [#allocation4], [#allocation2]
  %23 = dma.done [#allocation2], 32
  %24 = sfence
  $region1: #{tpu_custom_call.1} parent=0
    #allocation5 [shape = 'u8[65536]{0}', space=vmem, size = 0x10000, scoped, tag = 'input window, operand 5, single buffered']
    #allocation6 [shape = 's32[2]{0}', space=sflag, size = 0x8, scoped, tag = 'scoped memory for tpu_custom_call.1']
    #allocation7 [shape = 's32[2]{0}', space=sflag, size = 0x8, scoped, tag = 'scoped memory for tpu_custom_call.1']
    #allocation8 [shape = 'u8[1024]{0}', space=vmem, size = 0x400, scoped, tag = 'output window, operand 0']
    %25 = vsyncpa [#allocation6], 0
    %26 = vsyncpa [#allocation7], 0
    %s27 = scalar_lea.sflag [#allocation7], 1
    %28 = vsyncpa %s27, 0
    loop: start=0, step=1, limit=6
    $region2: #{tpu_custom_call.1} parent=1 // loop_pre_header
      _
    $region3: #{tpu_custom_call.1} parent=1 // loop_header
      %s30 = sphi 0, %s34
      %p31 = scmp.ge.s32.totalorder %s30, 6
      %s40 = sphi 0, %s42
      %s43 = sphi 0, %s40
      %s44 = sphi 0, %s43
      %s60 = sphi 0, %s44
      %s64 = sphi 0, %s64
      %s66 = sphi 0, %s64
      %s67 = sphi 0, %s66
      %s81 = sphi 0, %s67
      %s85 = sphi 0, %s85
      %s87 = sphi 0, %s85
      %s88 = sphi 0, %s87
      %s102 = sphi 0, %s88
      %s106 = sphi 0, %s106
      %s108 = sphi 0, %s106
      %s109 = sphi 0, %s108
      %s123 = sphi 0, %s109
      %s127 = sphi 0, %s127
      %s129 = sphi 0, %s127
      %s130 = sphi 0, %s129
      %s144 = sphi 0, %s130
      %s150 = sphi 0, %s152
      %s153 = sphi 0, %s150
      %s154 = sphi 0, %s153
      %s170 = sphi 0, %s154
    $region4: #{tpu_custom_call.1} parent=1 // loop_header_branch
      %33 = sbr.rel (%p31) target = $region8
    $region5: #{tpu_custom_call.1} parent=1 // loop_body
      %s35 = ssub.s32 %s30, 1
      %s36 = ssub.s32 %s30, 2
      %s37 = sadd.s32 %s30, 1
      %s38 = ssub.s32 %s30, %s37
      %p39 = scmp.eq.s32.totalorder %s38, 0
      %s41 = sadd.s32 %s40, 1
      %s42 = scalar_select %p39, %s40, %s41
      %p45 = pneg %p39
      %p46 = scmp.eq.s32.totalorder %s30, 3
      %p47 = por %p45, %p46
      %p48 = scmp.ne.s32.totalorder %s40, %s43
      %p49 = scmp.eq.s32.totalorder %s30, 0
      %p50 = por %p48, %p49
      %p51 = scmp.ne.s32.totalorder %s40, %s43
      %p52 = scmp.eq.s32.totalorder %s35, 3
      %p53 = por %p51, %p52
      %p54 = scmp.ne.s32.totalorder %s43, %s44
      %p55 = scmp.eq.s32.totalorder %s35, 0
      %p56 = por %p54, %p55
      %p57 = scmp.ne.s32.totalorder %s43, %s44
      %p58 = scmp.eq.s32.totalorder %s36, 3
      %p59 = por %p57, %p58
      %p61 = scmp.ne.s32.totalorder %s44, %s60
      %p62 = scmp.eq.s32.totalorder %s36, 0
      %p63 = por %p61, %p62
      %s65 = sadd.s32 %s64, 1
      %p68 = scmp.eq.s32.totalorder %s30, 3
      %p69 = scmp.ne.s32.totalorder %s64, %s66
      %p70 = scmp.eq.s32.totalorder %s30, 0
      %p71 = por %p69, %p70
      %p72 = scmp.ne.s32.totalorder %s64, %s66
      %p73 = scmp.eq.s32.totalorder %s35, 3
      %p74 = por %p72, %p73
      %p75 = scmp.ne.s32.totalorder %s66, %s67
      %p76 = scmp.eq.s32.totalorder %s35, 0
      %p77 = por %p75, %p76
      %p78 = scmp.ne.s32.totalorder %s66, %s67
      %p79 = scmp.eq.s32.totalorder %s36, 3
      %p80 = por %p78, %p79
      %p82 = scmp.ne.s32.totalorder %s67, %s81
      %p83 = scmp.eq.s32.totalorder %s36, 0
      %p84 = por %p82, %p83
      %s86 = sadd.s32 %s85, 1
      %p89 = scmp.eq.s32.totalorder %s30, 3
      %p90 = scmp.ne.s32.totalorder %s85, %s87
      %p91 = scmp.eq.s32.totalorder %s30, 0
      %p92 = por %p90, %p91
      %p93 = scmp.ne.s32.totalorder %s85, %s87
      %p94 = scmp.eq.s32.totalorder %s35, 3
      %p95 = por %p93, %p94
      %p96 = scmp.ne.s32.totalorder %s87, %s88
      %p97 = scmp.eq.s32.totalorder %s35, 0
      %p98 = por %p96, %p97
      %p99 = scmp.ne.s32.totalorder %s87, %s88
      %p100 = scmp.eq.s32.totalorder %s36, 3
      %p101 = por %p99, %p100
      %p103 = scmp.ne.s32.totalorder %s88, %s102
      %p104 = scmp.eq.s32.totalorder %s36, 0
      %p105 = por %p103, %p104
      %s107 = sadd.s32 %s106, 1
      %p110 = scmp.eq.s32.totalorder %s30, 3
      %p111 = scmp.ne.s32.totalorder %s106, %s108
      %p112 = scmp.eq.s32.totalorder %s30, 0
      %p113 = por %p111, %p112
      %p114 = scmp.ne.s32.totalorder %s106, %s108
      %p115 = scmp.eq.s32.totalorder %s35, 3
      %p116 = por %p114, %p115
      %p117 = scmp.ne.s32.totalorder %s108, %s109
      %p118 = scmp.eq.s32.totalorder %s35, 0
      %p119 = por %p117, %p118
      %p120 = scmp.ne.s32.totalorder %s108, %s109
      %p121 = scmp.eq.s32.totalorder %s36, 3
      %p122 = por %p120, %p121
      %p124 = scmp.ne.s32.totalorder %s109, %s123
      %p125 = scmp.eq.s32.totalorder %s36, 0
      %p126 = por %p124, %p125
      %s128 = sadd.s32 %s127, 1
      %p131 = scmp.eq.s32.totalorder %s30, 3
      %p132 = scmp.ne.s32.totalorder %s127, %s129
      %p133 = scmp.eq.s32.totalorder %s30, 0
      %p134 = por %p132, %p133
      %p135 = scmp.ne.s32.totalorder %s127, %s129
      %p136 = scmp.eq.s32.totalorder %s35, 3
      %p137 = por %p135, %p136
      %p138 = scmp.ne.s32.totalorder %s129, %s130
      %p139 = scmp.eq.s32.totalorder %s35, 0
      %p140 = por %p138, %p139
      %p141 = scmp.ne.s32.totalorder %s129, %s130
      %p142 = scmp.eq.s32.totalorder %s36, 3
      %p143 = por %p141, %p142
      %p145 = scmp.ne.s32.totalorder %s130, %s144
      %p146 = scmp.eq.s32.totalorder %s36, 0
      %p147 = por %p145, %p146
      %s148 = ssub.s32 %s30, %s37
      %p149 = scmp.eq.s32.totalorder %s148, 0
      %s151 = sadd.s32 %s150, 1
      %s152 = scalar_select %p149, %s150, %s151
      %p155 = pneg %p149
      %p156 = scmp.eq.s32.totalorder %s30, 3
      %p157 = por %p155, %p156
      %p158 = scmp.ne.s32.totalorder %s150, %s153
      %p159 = scmp.eq.s32.totalorder %s30, 0
      %p160 = por %p158, %p159
      %p161 = scmp.ne.s32.totalorder %s150, %s153
      %p162 = scmp.eq.s32.totalorder %s35, 3
      %p163 = por %p161, %p162
      %p164 = scmp.ne.s32.totalorder %s153, %s154
      %p165 = scmp.eq.s32.totalorder %s35, 0
      %p166 = por %p164, %p165
      %p167 = scmp.ne.s32.totalorder %s153, %s154
      %p168 = scmp.eq.s32.totalorder %s36, 3
      %p169 = por %p167, %p168
      %p171 = scmp.ne.s32.totalorder %s154, %s170
      %p172 = scmp.eq.s32.totalorder %s36, 0
      %p173 = por %p171, %p172
      %p174 = scmp.le.s32.totalorder 1, %s30
      %p175 = scmp.lt.s32.totalorder %s30, 5
      %p176 = pnand %p174, %p175
      %p177 = pneg %p176
      // Predicated region
      $region9: #{tpu_custom_call.1} parent=5 // pred_check
        _
      $region10: #{tpu_custom_call.1} parent=5 // pred_check_branch
        %179 = sbr.rel (%p176) target = $region12
      $region11: #{tpu_custom_call.1} parent=5 // pred_region
        %s180 = ssub.s32 %s30, 1
        // Predicated region
        $region13: #{tpu_custom_call.1} parent=11 // pred_check
          %p181 = pneg %p77
        $region14: #{tpu_custom_call.1} parent=11 // pred_check_branch
          %183 = sbr.rel (%p181) target = $region16
        $region15: #{tpu_custom_call.1} parent=11 // pred_region
          _
        $region16: #{tpu_custom_call.1} parent=11 // pred_fallthru
          _
        // Predicated region
        $region17: #{tpu_custom_call.1} parent=11 // pred_check
          %p184 = pneg %p98
        $region18: #{tpu_custom_call.1} parent=11 // pred_check_branch
          %186 = sbr.rel (%p184) target = $region20
        $region19: #{tpu_custom_call.1} parent=11 // pred_region
          _
        $region20: #{tpu_custom_call.1} parent=11 // pred_fallthru
          _
        // Predicated region
        $region21: #{tpu_custom_call.1} parent=11 // pred_check
          %p187 = pneg %p119
        $region22: #{tpu_custom_call.1} parent=11 // pred_check_branch
          %189 = sbr.rel (%p187) target = $region24
        $region23: #{tpu_custom_call.1} parent=11 // pred_region
          %191 = vsyncadd [#allocation6], 0
          %s192 = sshll.u32 %s5, 4
          %s193 = int_to_ptr.hbm [resolvable:$true] %s192
          %s194 = sshll.u32 [#allocation5], 4
          %s195 = int_to_ptr.vmem [resolvable:$true] %s194
          %200 = dma.hbm_to_vmem [thread:$0]  %s193, 2048, %s195, [#allocation6], 64, 64, 4
        $region24: #{tpu_custom_call.1} parent=11 // pred_fallthru
          _
        // Predicated region
        $region25: #{tpu_custom_call.1} parent=11 // pred_check
          %p201 = pneg %p140
        $region26: #{tpu_custom_call.1} parent=11 // pred_check_branch
          %203 = sbr.rel (%p201) target = $region28
        $region27: #{tpu_custom_call.1} parent=11 // pred_region
          _
        $region28: #{tpu_custom_call.1} parent=11 // pred_fallthru
          _
      $region12: #{tpu_custom_call.1} parent=5 // pred_fallthru
        _
      %p204 = scmp.lt.s32.totalorder %s30, 4
      // Predicated region
      $region29: #{tpu_custom_call.1} parent=5 // pred_check
        %p205 = pneg %p204
      $region30: #{tpu_custom_call.1} parent=5 // pred_check_branch
        %207 = sbr.rel (%p205) target = $region32
      $region31: #{tpu_custom_call.1} parent=5 // pred_region
        // Predicated region
        $region33: #{tpu_custom_call.1} parent=31 // pred_check
          %p208 = pneg %p50
        $region34: #{tpu_custom_call.1} parent=31 // pred_check_branch
          %210 = sbr.rel (%p208) target = $region36
        $region35: #{tpu_custom_call.1} parent=31 // pred_region
          %p211 = scmp.lt.s32.totalorder %s30, 3
          %s212 = scalar_select %p211, %s30, 3
          %s213 = scalar_lea.vmem %s2, %s212
        $region36: #{tpu_custom_call.1} parent=31 // pred_fallthru
          _
      $region32: #{tpu_custom_call.1} parent=5 // pred_fallthru
        _
      %p214 = scmp.le.s32.totalorder 1, %s30
      %p215 = scmp.lt.s32.totalorder %s30, 5
      %p216 = pnand %p214, %p215
      %p217 = pneg %p216
      // Predicated region
      $region37: #{tpu_custom_call.1} parent=5 // pred_check
        _
      $region38: #{tpu_custom_call.1} parent=5 // pred_check_branch
        %219 = sbr.rel (%p216) target = $region40
      $region39: #{tpu_custom_call.1} parent=5 // pred_region
        %s220 = ssub.s32 %s30, 1
        // Predicated region
        $region41: #{tpu_custom_call.1} parent=39 // pred_check
          %p221 = pneg %p119
        $region42: #{tpu_custom_call.1} parent=39 // pred_check_branch
          %223 = sbr.rel (%p221) target = $region44
        $region43: #{tpu_custom_call.1} parent=39 // pred_region
          %225 = dma.done [#allocation6], 2048
        $region44: #{tpu_custom_call.1} parent=39 // pred_fallthru
          _
        %p226 = scmp.lt.s32.totalorder %s35, 3
        %s227 = scalar_select %p226, %s35, 3
        %s228 = scalar_lea.vmem %s2, %s227
        %p229 = pneg %p56
        %p230 = pneg %p53
        %p231 = pneg %p77
        %p232 = pneg %p74
        %p233 = pneg %p98
        %p234 = pneg %p95
        %p235 = pneg %p119
        %p236 = pneg %p116
        %p237 = pneg %p140
        %p238 = pneg %p137
        %p239 = pneg %p166
        %p240 = pneg %p163
        %s241 = sand.u32 %s153, 1
        %s242 = scalar_lea.sflag [#allocation7], %s241
        %s243 = sand.u32 %s153, 1
        %s244 = scalar_lea.vmem [#allocation8], %s243
        %p245 = scmp.lt.s32.totalorder %s35, 3
        %s246 = scalar_select %p245, %s35, 3
        %s247 = scalar_lea.vmem %s2, %s246
        %s249 = sld [smem:[#allocation3 + %s35]]
        %v250 = vld [vmem:[%s247] sm:$0x1]
        %v251 = vld [vmem:[%s3] sm:$0xf]
        %v252 = vld [vmem:[%s3 + $0x4] sm:$0xf]
        %v255 = vunpack.c.l.b16 %v251
        %v256 = vunpack.c.l.b16 %v252
        %v257 = vpack.c.b16 %v256, %v255
        %vm259 = vcmask 130048
        %v261 = vsel %vm259, %v250, 0
        %263 = vmatpush.bf16.msra.mxu0 0
        %264 = vmatpush.bf16.msra.mxu0 0
        %265 = vmatpush.bf16.msra.mxu0 0
        %266 = vmatpush.bf16.msra.mxu0 0
        %267 = vmatpush.bf16.msra.mxu0 0
        %268 = vmatpush.bf16.msra.mxu0 0
        %269 = vmatpush.bf16.msra.mxu0 0
        %270 = vmatpush.bf16.msra.mxu0 %v257
        %271 = vmatmul.bf16.gmra.mxu0 %v261
        %v272 = vpop.f32.mrf.mxu0
        %v273 = vadd.f32 0.0, %v272
        %v274 = vpop.f32.mrf.mxu0
        %275 = vdwg.mxu0
        %v276 = vmax.f32 %v273, 0.0
        %s277 = smul.u32 %s249, 2
        %s278 = scalar_lea.vmem %s6, %s277
        %v279 = vld [vmem:[%s278] sm:$0x3]
        %v280 = vpack.c.bf16 %v276, %v276
        %v281 = vld [vmem:[%s4] sm:$0xf]
        %v282 = vld [vmem:[%s4 + $0x4] sm:$0xf]
        %v283 = vld [vmem:[%s4 + $0x8] sm:$0xf]
        %v284 = vld [vmem:[%s4 + $0xc] sm:$0xf]
        %v285 = vld [vmem:[%s4 + $0x10] sm:$0xf]
        %v286 = vld [vmem:[%s4 + $0x14] sm:$0xf]
        %v287 = vld [vmem:[%s4 + $0x18] sm:$0xf]
        %v288 = vld [vmem:[%s4 + $0x1c] sm:$0xf]
        %v289 = vld [vmem:[%s4 + $0x20] sm:$0xf]
        %v290 = vld [vmem:[%s4 + $0x24] sm:$0xf]
        %v291 = vld [vmem:[%s4 + $0x28] sm:$0xf]
        %v292 = vld [vmem:[%s4 + $0x2c] sm:$0xf]
        %v293 = vld [vmem:[%s4 + $0x30] sm:$0xf]
        %v294 = vld [vmem:[%s4 + $0x34] sm:$0xf]
        %v295 = vld [vmem:[%s4 + $0x38] sm:$0xf]
        %v296 = vld [vmem:[%s4 + $0x3c] sm:$0xf]
        %v313 = vunpack.c.l.b16 %v281
        %v314 = vunpack.c.l.b16 %v282
        %v315 = vunpack.c.l.b16 %v283
        %v316 = vunpack.c.l.b16 %v284
        %v317 = vunpack.c.l.b16 %v285
        %v318 = vunpack.c.l.b16 %v286
        %v319 = vunpack.c.l.b16 %v287
        %v320 = vunpack.c.l.b16 %v288
        %v321 = vunpack.c.l.b16 %v289
        %v322 = vunpack.c.l.b16 %v290
        %v323 = vunpack.c.l.b16 %v291
        %v324 = vunpack.c.l.b16 %v292
        %v325 = vunpack.c.l.b16 %v293
        %v326 = vunpack.c.l.b16 %v294
        %v327 = vunpack.c.l.b16 %v295
        %v328 = vunpack.c.l.b16 %v296
        %v329 = vpack.c.b16 %v314, %v313
        %v330 = vpack.c.b16 %v316, %v315
        %v331 = vpack.c.b16 %v318, %v317
        %v332 = vpack.c.b16 %v320, %v319
        %v333 = vpack.c.b16 %v322, %v321
        %v334 = vpack.c.b16 %v324, %v323
        %v335 = vpack.c.b16 %v326, %v325
        %v336 = vpack.c.b16 %v328, %v327
        %345 = vmatpush.bf16.msra.mxu0 %v336
        %346 = vmatpush.bf16.msra.mxu0 %v335
        %347 = vmatpush.bf16.msra.mxu0 %v334
        %348 = vmatpush.bf16.msra.mxu0 %v333
        %349 = vmatpush.bf16.msra.mxu0 %v332
        %350 = vmatpush.bf16.msra.mxu0 %v331
        %351 = vmatpush.bf16.msra.mxu0 %v330
        %352 = vmatpush.bf16.msra.mxu0 %v329
        %353 = vmatmul.bf16.gmra.mxu0 %v280
        %v354 = vpop.f32.mrf.mxu0
        %v355 = vadd.f32 %v279, %v354
        %v356 = vpop.f32.mrf.mxu0
        %357 = vdwg.mxu0
        %v358 = vmax.f32 %v355, 0.0
        %s359 = smul.u32 %s249, 8
        %s360 = smul.addr %s359, 4
        %s361 = scalar_lea.vmem [#allocation5], %s360
        %v362 = vld [vmem:[%s361] sm:$0xf]
        %v363 = vld [vmem:[%s361 + $0x4] sm:$0xf]
        %v364 = vld [vmem:[%s361 + $0x8] sm:$0xf]
        %v365 = vld [vmem:[%s361 + $0xc] sm:$0xf]
        %v366 = vld [vmem:[%s361 + $0x10] sm:$0xf]
        %v367 = vld [vmem:[%s361 + $0x14] sm:$0xf]
        %v368 = vld [vmem:[%s361 + $0x18] sm:$0xf]
        %v369 = vld [vmem:[%s361 + $0x1c] sm:$0xf]
        %v370 = vpack.c.bf16 %v358, %v358
        %v379 = vunpack.c.l.b16 %v362
        %v380 = vunpack.c.l.b16 %v363
        %v381 = vunpack.c.l.b16 %v364
        %v382 = vunpack.c.l.b16 %v365
        %v383 = vunpack.c.l.b16 %v366
        %v384 = vunpack.c.l.b16 %v367
        %v385 = vunpack.c.l.b16 %v368
        %v386 = vunpack.c.l.b16 %v369
        %v387 = vpack.c.b16 %v380, %v379
        %v388 = vpack.c.b16 %v382, %v381
        %v389 = vpack.c.b16 %v384, %v383
        %v390 = vpack.c.b16 %v386, %v385
        %v396 = vrot.slane %v279, 1
        %vm398 = vcmask 523264
        %v400 = vsel %vm398, %v370, 0
        %402 = vmatpush.bf16.msra.mxu0 0
        %403 = vmatpush.bf16.msra.mxu0 0
        %404 = vmatpush.bf16.msra.mxu0 0
        %405 = vmatpush.bf16.msra.mxu0 0
        %406 = vmatpush.bf16.msra.mxu0 %v390
        %407 = vmatpush.bf16.msra.mxu0 %v389
        %408 = vmatpush.bf16.msra.mxu0 %v388
        %409 = vmatpush.bf16.msra.mxu0 %v387
        %410 = vmatmul.bf16.gmra.mxu0 %v400
        %v411 = vpop.f32.mrf.mxu0
        %v412 = vadd.f32 %v396, %v411
        %v413 = vpop.f32.mrf.mxu0
        %414 = vdwg.mxu0
        %s415 = sld [smem:[#allocation4 + %s249]]
        %v416 = vlaneseq
        %v417 = vand.u32 %v416, 127
        %v418 = vstv %s415
        %vm419 = vcmp.lt.s32.totalorder %v417, %v418
        %v420 = vsel %vm419, %v412, -inf
        %vm421 = vcmask 1040384
        %v422 = vsel %vm421, %v420, -inf
        %423 = vmax.xlane.f32.xlu0 %v422
        %v424 = vpop.xlane.xlu0 %423
        %v425 = vsub.f32 %v420, %v424
        %v426 = vmul.f32 %v425, 1.442695
        %v427 = vpow.pop %v426
        %v428 = vsel %vm421, %v427, 0.0
        %429 = vadd.xlane.f32.xlu0 %v428
        %v430 = vpop.xlane.xlu0 %429
        %v431 = vrcp.pop %v430
        %v432 = vmul.f32 %v427, %v431
        %433 = vst [vmem:[%s244] sm:$0x1] %v432
        %s434 = sand.u32 %s153, 1
        %s435 = scalar_lea.sflag [#allocation7], %s434
        %s436 = sand.u32 %s153, 1
        %s437 = scalar_lea.vmem [#allocation8], %s436
        // Predicated region
        $region45: #{tpu_custom_call.1} parent=39 // pred_check
          %p438 = pneg %p163
        $region46: #{tpu_custom_call.1} parent=39 // pred_check_branch
          %440 = sbr.rel (%p438) target = $region48
        $region47: #{tpu_custom_call.1} parent=39 // pred_region
          %442 = vsyncadd %s435, 0
          %s443 = scalar_lea.hbm %s7, %s35
          %s445 = sshll.u32 %s437, 4
          %s446 = int_to_ptr.vmem [resolvable:$true] %s445
          %s447 = sshll.u32 %s443, 4
          %s448 = int_to_ptr.hbm [resolvable:$true] %s447
          %450 = dma.vmem_to_hbm [thread:$0]  %s446, 16, %s448, %s435
        $region48: #{tpu_custom_call.1} parent=39 // pred_fallthru
          _
      $region40: #{tpu_custom_call.1} parent=5 // pred_fallthru
        _
      %p451 = scmp.le.s32.totalorder 2, %s30
      // Predicated region
      $region49: #{tpu_custom_call.1} parent=5 // pred_check
        %p452 = pneg %p451
      $region50: #{tpu_custom_call.1} parent=5 // pred_check_branch
        %454 = sbr.rel (%p452) target = $region52
      $region51: #{tpu_custom_call.1} parent=5 // pred_region
        %s455 = ssub.s32 %s30, 2
        // Predicated region
        $region53: #{tpu_custom_call.1} parent=51 // pred_check
          %p456 = pneg %p169
        $region54: #{tpu_custom_call.1} parent=51 // pred_check_branch
          %458 = sbr.rel (%p456) target = $region56
        $region55: #{tpu_custom_call.1} parent=51 // pred_region
          %s459 = sand.u32 %s154, 1
          %s460 = scalar_lea.sflag [#allocation7], %s459
          %s461 = sand.u32 %s154, 1
          %s462 = scalar_lea.vmem [#allocation8], %s461
          %464 = dma.done %s460, 16
        $region56: #{tpu_custom_call.1} parent=51 // pred_fallthru
          _
      $region52: #{tpu_custom_call.1} parent=5 // pred_fallthru
        _
    $region6: #{tpu_custom_call.1} parent=1 // loop_footer
      %s34 = sadd.s32 1, %s30
    $region7: #{tpu_custom_call.1} parent=1 // loop_footer_branch
      %29 = sbr.rel target = $region3
    $region8: #{tpu_custom_call.1} parent=1 // loop_exit
      _
    %465 = vsyncpa [#allocation6], 1
    %s466 = scalar_lea.sflag [#allocation6], 1
    %467 = vsyncpa %s466, 1
    %468 = vsyncpa [#allocation7], 1
    %s469 = scalar_lea.sflag [#allocation7], 1
    %470 = vsyncpa %s469, 1

</llo_original>
